<compile_context>
chip_gen: v7x
topology: tpu7x:2x2x1
jax: 0.10.0
libtpu: 0.0.40
codegen_flags: <defaults>
</compile_context>

<pallas_src>
import functools

import jax
import jax.numpy as jnp
from jax import lax
from jax.experimental import pallas as pl
from jax.experimental.pallas import tpu as pltpu


def _basic_block_kernel(K, pad, D,
                        x_ref,               # (B, Lq, s*Cin) bf16  phase-split conv1 input
                        w1_ref,              # (D*s*Cin, Cp)  bf16
                        s1_ref, b1_ref,      # (1, Cp)        f32   folded BN1
                        w2_ref,              # (K*Cp, Cp)     bf16
                        s2_ref, b2_ref,      # (1, Cp)        f32   folded BN2
                        sew1_ref,            # (Cp, Chid)     bf16  SE fc1 (right-mult)
                        sew2_ref,            # (Chid, Cp)     bf16  SE fc2 (right-mult)
                        xmp_ref,             # (B, L1, Cin)   bf16  maxpooled shortcut input
                        wsc_ref,             # (Cin, Cp)      bf16  1x1 shortcut conv
                        ssc_ref, bsc_ref,    # (1, Cp)        f32   folded shortcut BN
                        o_ref):              # (B, L1, Cp)    f32
    B, L1, Cp = o_ref.shape
    BL = B * L1
    f32, bf16 = jnp.float32, jnp.bfloat16

    # ---- Conv1: gather D contiguous row-shifted slabs -> one MXU matmul + BN1 + ReLU -
    # f32 while merging (B, L1) -> B*L1 so the reshape is a tile-clean no-op, then bf16
    # for the MXU operand.
    # TODO(synk): training-mode BatchNorm (batch stats) and active Dropout are not
    # implemented; this is the eval-mode forward (BN folded, Dropout = identity).
    x = x_ref[...].astype(f32)                                         # (B, Lq, s*Cin)
    xcol = jnp.concatenate([x[:, d:d + L1, :] for d in range(D)], axis=-1)
    xcol = xcol.reshape(BL, -1).astype(bf16)                           # (BL, D*s*Cin)
    h1 = jnp.dot(xcol, w1_ref[...], preferred_element_type=f32)
    h1 = jnp.maximum(h1 * s1_ref[...] + b1_ref[...], 0.0)              # (BL, Cp) f32

    # ---- Conv2 (stride 1, same padding) + BN2 --------------------------------------
    # K shifted copies of h1 via XLU roll over the flat (BL, Cp) slab; per-row masking
    # handles both the length padding and the batch boundaries; taps cast to bf16 so
    # the wide concat / matmul operand is half-width.
    row_in = lax.broadcasted_iota(jnp.int32, (BL, Cp), 0) % L1
    taps = []
    for t in range(K):
        sft = t - pad
        if sft == 0:
            tap = h1.astype(bf16)
        else:
            shifted = pltpu.roll(h1, shift=(-sft) % BL, axis=0)
            valid = jnp.logical_and(row_in + sft >= 0, row_in + sft < L1)
            tap = jnp.where(valid, shifted, 0.0).astype(bf16)
        taps.append(tap)
    h1col = jnp.concatenate(taps, axis=1)                              # (BL, K*Cp) bf16
    h2 = jnp.dot(h1col, w2_ref[...], preferred_element_type=f32)
    h2 = h2 * s2_ref[...] + b2_ref[...]                                # (BL, Cp) f32

    # ---- SELayer1D: per-sample global avg pool -> fc -> ReLU -> fc -> sigmoid -> scale
    h2b = h2.reshape(B, L1, Cp)                                        # f32 split: no-op
    alpha = jnp.mean(h2b, axis=1)                                      # (B, Cp)
    hid = jnp.maximum(jnp.dot(alpha.astype(bf16), sew1_ref[...],
                              preferred_element_type=f32), 0.0)        # (B, Chid)
    gate = jax.nn.sigmoid(jnp.dot(hid.astype(bf16), sew2_ref[...],
                                  preferred_element_type=f32))         # (B, Cp)
    op = h2b * gate[:, None, :]                                        # (B, L1, Cp)

    # ---- Shortcut: (MaxPool done in wrapper) -> 1x1 conv -> BN -----------------------
    xmp = xmp_ref[...].astype(f32).reshape(BL, -1).astype(bf16)        # (BL, Cin)
    sc = jnp.dot(xmp, wsc_ref[...], preferred_element_type=f32)
    sc = (sc * ssc_ref[...] + bsc_ref[...]).reshape(B, L1, Cp)

    # ---- Residual add + final ReLU (lane-dense store; bf16 output possible if the
    # downstream consumer tolerates it) ------------------------------------------------
    o_ref[...] = jnp.maximum(op + sc, 0.0)


def _round_up(x, m):
    return (x + m - 1) // m * m


def _pick_batch_block(N, L1, target_rows=256):
    """Largest divisor of N with roughly B*L1 <= target_rows (feed the MXU M dim)."""
    B = max(1, min(N, target_rows // max(L1, 1)))
    while N % B:
        B -= 1
    return B


def basic_block_pallas(x_ncl, params, *, K, stride, batch_block=None):
    """x_ncl: (N, Cin, L) f32 in PyTorch NCL layout; params in PyTorch layouts with
    BatchNorms pre-folded to (scale, bias). Returns (N, Cout, L_out) f32."""
    (w1_t, s1, b1, w2_t, s2, b2, sew1, sew2, wsc_t, ssc, bsc) = params
    N, Cin, L = x_ncl.shape
    Cout = w1_t.shape[0]
    Chid = sew1.shape[1]
    pad = K // 2
    L1 = (L + 2 * pad - K) // stride + 1
    assert -(-L // stride) == L1, "conv / shortcut output lengths must match"
    assert stride == 1 or L % stride == 0, "demo restricted to clean maxpool windows"
    assert L1 >= K, "roll-based conv2 taps need L1 >= K so wrapped rows are fully masked"

    LANES = 128
    Cp = _round_up(Cout, LANES)          # lane-dense stores / full MXU output lanes
    cpad = Cp - Cout
    f32, bf16 = jnp.float32, jnp.bfloat16

    s = stride
    D = (K - 1) // s + 1                 # row-shifted slabs the kernel gathers for conv1
    Cg = s * Cin                         # channels per phase-split row
    Lq = max(-(-(L + 2 * pad) // s), L1 + D - 1)
    Kg = D * Cg                          # conv1 contraction depth (zero rows for unused taps)

    # ---- activations (shipped once, bf16): phase-split conv1 input + shortcut maxpool -
    # NOTE: keep the model in NLC / channel-padded layout across consecutive blocks so
    # these transposes/pads happen only at the network boundary.
    x_nlc = jnp.transpose(x_ncl, (0, 2, 1)).astype(f32)                 # (N, L, Cin)
    x_padL = jnp.pad(x_nlc, ((0, 0), (pad, Lq * s - L - pad), (0, 0)))  # (N, Lq*s, Cin)
    x_rs = x_padL.reshape(N, Lq, Cg).astype(bf16)                       # (N, Lq, s*Cin)
    if stride == 1:
        x_mp = x_nlc
    else:
        x_mp = x_nlc.reshape(N, L1, stride, Cin).max(axis=2)            # MaxPool1d(stride)
    x_mp = x_mp.astype(bf16)                                            # (N, L1, Cin)

    # ---- weights: right-multiply layout, zero-pad Cout -> Cp, bf16 matmul operands ----
    def pad_c(a, axis):
        cfg = [(0, 0)] * a.ndim
        cfg[axis] = (0, cpad)
        return jnp.pad(a, cfg)

    # conv1 weight rows indexed by (d*s + p)*Cin + c == tap*Cin + c; taps >= K are zero.
    w1_kio = jnp.transpose(w1_t, (2, 1, 0))                             # (K, Cin, Cout)
    w1_kio = jnp.pad(w1_kio, ((0, D * s - K), (0, 0), (0, cpad)))       # (D*s, Cin, Cp)
    w1_col = w1_kio.reshape(Kg, Cp).astype(bf16)

    w2_col = pad_c(pad_c(jnp.transpose(w2_t, (2, 1, 0)), 1), 2).reshape(K * Cp, Cp).astype(bf16)
    wsc_rm = pad_c(jnp.transpose(wsc_t[:, :, 0], (1, 0)), 1).astype(bf16)   # (Cin, Cp)
    sew1_p = pad_c(sew1, 0).astype(bf16)                                # (Cp, Chid)
    sew2_p = pad_c(sew2, 1).astype(bf16)                                # (Chid, Cp)

    def pad_vec(v):
        return jnp.pad(v, (0, cpad))[None, :].astype(f32)               # (1, Cp)

    s1p, b1p = pad_vec(s1), pad_vec(b1)
    s2p, b2p = pad_vec(s2), pad_vec(b2)
    sscp, bscp = pad_vec(ssc), pad_vec(bsc)

    # ---- batching over the grid: B samples per step, flattened to B*L1 rows in-kernel -
    B = batch_block if batch_block is not None else _pick_batch_block(N, L1)
    assert N % B == 0
    grid = (N // B,)

    # ---- VMEM budget (double-buffered blocks + constants + live temporaries) ----------
    blk_io = 2 * (B * Lq * Cg * 2 + B * L1 * Cin * 2 + B * L1 * Cp * 4)
    consts = 2 * ((Kg * Cp + K * Cp * Cp + Cin * Cp + Cp * Chid + Chid * Cp) * 2 + 6 * Cp * 4)
    temps = B * L1 * Cp * (6 * 4 + (K + 1) * 2)     # h1/h2/op/sc/rolled/iota f32 + bf16 taps
    vmem_limit = int(min(64 * 2 ** 20, max(32 * 2 ** 20, 2 * (blk_io + consts + temps))))

    kernel = functools.partial(_basic_block_kernel, K, pad, D)

    out_nlc = pl.pallas_call(
        kernel,
        out_shape=jax.ShapeDtypeStruct((N, L1, Cp), f32),
        grid_spec=pltpu.PrefetchScalarGridSpec(
            num_scalar_prefetch=0,
            grid=grid,
            in_specs=[
                pl.BlockSpec((B, Lq, Cg), lambda n: (n, 0, 0)),        # x_rs
                pl.BlockSpec((Kg, Cp), lambda n: (0, 0)),              # w1
                pl.BlockSpec((1, Cp), lambda n: (0, 0)),               # s1
                pl.BlockSpec((1, Cp), lambda n: (0, 0)),               # b1
                pl.BlockSpec((K * Cp, Cp), lambda n: (0, 0)),          # w2
                pl.BlockSpec((1, Cp), lambda n: (0, 0)),               # s2
                pl.BlockSpec((1, Cp), lambda n: (0, 0)),               # b2
                pl.BlockSpec((Cp, Chid), lambda n: (0, 0)),            # sew1
                pl.BlockSpec((Chid, Cp), lambda n: (0, 0)),            # sew2
                pl.BlockSpec((B, L1, Cin), lambda n: (n, 0, 0)),       # x_mp
                pl.BlockSpec((Cin, Cp), lambda n: (0, 0)),             # wsc
                pl.BlockSpec((1, Cp), lambda n: (0, 0)),               # ssc
                pl.BlockSpec((1, Cp), lambda n: (0, 0)),               # bsc
            ],
            out_specs=pl.BlockSpec((B, L1, Cp), lambda n: (n, 0, 0)),
        ),
        compiler_params=pltpu.CompilerParams(
            dimension_semantics=("parallel",),
            vmem_limit_bytes=vmem_limit),
    )(x_rs, w1_col, s1p, b1p, w2_col, s2p, b2p, sew1_p, sew2_p, x_mp, wsc_rm, sscp, bscp)

    # drop zero-padded channels (no-op when Cout % 128 == 0), back to NCL
    if cpad:
        out_nlc = out_nlc[:, :, :Cout]
    return jnp.transpose(out_nlc, (0, 2, 1))


def _fold_bn(gamma, beta, mean, var, eps=1e-5):
    scale = gamma / jnp.sqrt(var + eps)
    bias = beta - mean * scale
    return scale, bias


def reference_forward(x, w1_t, s1, b1, w2_t, s2, b2, sew1, sew2, wsc_t, ssc, bsc,
                      *, stride, pad):
    """Pure-JAX reference, PyTorch NCL layout (eval-mode BN, identity dropout).
    Matmul operands are bf16-rounded to mirror the kernel's MXU precision."""
    dn = ("NCH", "OIH", "NCH")
    f32 = jnp.float32

    def r(a):
        return a.astype(jnp.bfloat16).astype(f32)

    y = lax.conv_general_dilated(r(x), r(w1_t), (stride,), [(pad, pad)], dimension_numbers=dn)
    y = jnp.maximum(y * s1[None, :, None] + b1[None, :, None], 0.0)
    y = lax.conv_general_dilated(r(y), r(w2_t), (1,), [(pad, pad)], dimension_numbers=dn)
    y = y * s2[None, :, None] + b2[None, :, None]
    alpha = jnp.mean(y, axis=-1)                                   # (N, Cout)
    alpha = jnp.maximum(r(alpha) @ r(sew1), 0.0)
    alpha = jax.nn.sigmoid(r(alpha) @ r(sew2))
    op = y * alpha[:, :, None]
    N, Cin, L = x.shape
    sc = x.reshape(N, Cin, L // stride, stride).max(axis=-1)       # MaxPool1d(stride)
    sc = jnp.einsum("ncl,oc->nol", r(sc), r(wsc_t[:, :, 0]))       # 1x1 conv
    sc = sc * ssc[None, :, None] + bsc[None, :, None]
    return jnp.maximum(op + sc, 0.0)


if __name__ == "__main__":
    # Small shapes implied by the module: Conv1d over (N, C, L)
    N, Cin, Cout, L = 2, 8, 32, 16
    K, stride = 3, 2
    reduction = 16
    Chid = Cout // reduction
    pad = K // 2

    key = jax.random.PRNGKey(0)
    ks = jax.random.split(key, 16)

    x = jax.random.normal(ks[0], (N, Cin, L), jnp.float32)

    # PyTorch weight layouts for conv: (O, I, K); SE weights as right-multiply matrices.
    w1_t = 0.1 * jax.random.normal(ks[1], (Cout, Cin, K), jnp.float32)
    w2_t = 0.1 * jax.random.normal(ks[2], (Cout, Cout, K), jnp.float32)
    wsc_t = 0.1 * jax.random.normal(ks[3], (Cout, Cin, 1), jnp.float32)
    sew1 = 0.1 * jax.random.normal(ks[4], (Cout, Chid), jnp.float32)
    sew2 = 0.1 * jax.random.normal(ks[5], (Chid, Cout), jnp.float32)

    def bn_params(k, C):
        a, b, c, d = jax.random.split(k, 4)
        gamma = jax.random.uniform(a, (C,), jnp.float32, 0.5, 1.5)
        beta = 0.1 * jax.random.normal(b, (C,), jnp.float32)
        mean = 0.1 * jax.random.normal(c, (C,), jnp.float32)
        var = jax.random.uniform(d, (C,), jnp.float32, 0.5, 1.5)
        return _fold_bn(gamma, beta, mean, var)

    s1, b1 = bn_params(ks[6], Cout)
    s2, b2 = bn_params(ks[7], Cout)
    ssc, bsc = bn_params(ks[8], Cout)

    params = (w1_t, s1, b1, w2_t, s2, b2, sew1, sew2, wsc_t, ssc, bsc)

    out = basic_block_pallas(x, params, K=K, stride=stride)
    out = jax.block_until_ready(out)

    ref = reference_forward(x, w1_t, s1, b1, w2_t, s2, b2, sew1, sew2,
                            wsc_t, ssc, bsc, stride=stride, pad=pad)
    ref = jax.block_until_ready(ref)

    assert out.shape == (N, Cout, (L + 2 * pad - K) // stride + 1), out.shape
    assert jnp.allclose(out, ref, atol=5e-3, rtol=5e-3), float(jnp.max(jnp.abs(out - ref)))
    print("KERNEL_OK")
</pallas_src>

<mosaic_0001>
module attributes {stable_mosaic.version = 11 : i64} {
  func.func @_basic_block_kernel(%arg0: i32, %arg1: memref<2x9x16xbf16, #tpu.memory_space<vmem>>, %arg2: memref<32x128xbf16, #tpu.memory_space<vmem>>, %arg3: memref<1x128xf32, #tpu.memory_space<vmem>>, %arg4: memref<1x128xf32, #tpu.memory_space<vmem>>, %arg5: memref<384x128xbf16, #tpu.memory_space<vmem>>, %arg6: memref<1x128xf32, #tpu.memory_space<vmem>>, %arg7: memref<1x128xf32, #tpu.memory_space<vmem>>, %arg8: memref<128x2xbf16, #tpu.memory_space<vmem>>, %arg9: memref<2x128xbf16, #tpu.memory_space<vmem>>, %arg10: memref<2x8x8xbf16, #tpu.memory_space<vmem>>, %arg11: memref<8x128xbf16, #tpu.memory_space<vmem>>, %arg12: memref<1x128xf32, #tpu.memory_space<vmem>>, %arg13: memref<1x128xf32, #tpu.memory_space<vmem>>, %arg14: memref<2x8x128xf32, #tpu.memory_space<vmem>>) attributes {dimension_semantics = [#tpu.dimension_semantics<parallel>], iteration_bounds = array<i64: 1>, scalar_prefetch = 0 : i64, scratch_operands = 0 : i64, tpu.core_type = #tpu.core_type<tc>, window_params = [{transform_indices = @transform_0, window_bounds = array<i64: 2, 9, 16>}, {pipeline_mode = #tpu.pipeline_mode<synchronous>, transform_indices = @transform_1, window_bounds = array<i64: 32, 128>}, {pipeline_mode = #tpu.pipeline_mode<synchronous>, transform_indices = @transform_2, window_bounds = array<i64: 1, 128>}, {pipeline_mode = #tpu.pipeline_mode<synchronous>, transform_indices = @transform_3, window_bounds = array<i64: 1, 128>}, {pipeline_mode = #tpu.pipeline_mode<synchronous>, transform_indices = @transform_4, window_bounds = array<i64: 384, 128>}, {pipeline_mode = #tpu.pipeline_mode<synchronous>, transform_indices = @transform_5, window_bounds = array<i64: 1, 128>}, {pipeline_mode = #tpu.pipeline_mode<synchronous>, transform_indices = @transform_6, window_bounds = array<i64: 1, 128>}, {pipeline_mode = #tpu.pipeline_mode<synchronous>, transform_indices = @transform_7, window_bounds = array<i64: 128, 2>}, {pipeline_mode = #tpu.pipeline_mode<synchronous>, transform_indices = @transform_8, window_bounds = array<i64: 2, 128>}, {transform_indices = @transform_9, window_bounds = array<i64: 2, 8, 8>}, {pipeline_mode = #tpu.pipeline_mode<synchronous>, transform_indices = @transform_10, window_bounds = array<i64: 8, 128>}, {pipeline_mode = #tpu.pipeline_mode<synchronous>, transform_indices = @transform_11, window_bounds = array<i64: 1, 128>}, {pipeline_mode = #tpu.pipeline_mode<synchronous>, transform_indices = @transform_12, window_bounds = array<i64: 1, 128>}, {transform_indices = @transform_13, window_bounds = array<i64: 2, 8, 128>}]} {
    %c0 = arith.constant 0 : index
    %c0_0 = arith.constant 0 : index
    %c0_1 = arith.constant 0 : index
    %0 = vector.load %arg1[%c0, %c0_0, %c0_1] : memref<2x9x16xbf16, #tpu.memory_space<vmem>>, vector<2x9x16xbf16>
    %1 = arith.extf %0 : vector<2x9x16xbf16> to vector<2x9x16xf32>
    %2 = vector.extract_strided_slice %1 {offsets = [0, 0, 0], sizes = [2, 8, 16], strides = [1, 1, 1]} : vector<2x9x16xf32> to vector<2x8x16xf32>
    %3 = vector.extract_strided_slice %1 {offsets = [0, 1, 0], sizes = [2, 8, 16], strides = [1, 1, 1]} : vector<2x9x16xf32> to vector<2x8x16xf32>
    %4 = tpu.concatenate %2, %3 in 2 : vector<2x8x16xf32>, vector<2x8x16xf32> -> vector<2x8x32xf32>
    %5 = vector.shape_cast %4 : vector<2x8x32xf32> to vector<16x32xf32>
    %6 = arith.truncf %5 : vector<16x32xf32> to vector<16x32xbf16>
    %c0_2 = arith.constant 0 : index
    %c0_3 = arith.constant 0 : index
    %7 = vector.load %arg2[%c0_2, %c0_3] : memref<32x128xbf16, #tpu.memory_space<vmem>>, vector<32x128xbf16>
    %cst = arith.constant dense<0.000000e+00> : vector<16x128xf32>
    %8 = tpu.matmul %6, %7, %cst {dimension_numbers = #tpu.dot_dimension_numbers<[1], [0], [0], [1], [0, 0, 1, 1], [], []>} : vector<16x32xbf16>, vector<32x128xbf16>, vector<16x128xf32> -> vector<16x128xf32>
    %c0_4 = arith.constant 0 : index
    %c0_5 = arith.constant 0 : index
    %9 = vector.load %arg3[%c0_4, %c0_5] : memref<1x128xf32, #tpu.memory_space<vmem>>, vector<1x128xf32>
    %10 = vector.broadcast %9 : vector<1x128xf32> to vector<16x128xf32>
    %11 = arith.mulf %8, %10 : vector<16x128xf32>
    %c0_6 = arith.constant 0 : index
    %c0_7 = arith.constant 0 : index
    %12 = vector.load %arg4[%c0_6, %c0_7] : memref<1x128xf32, #tpu.memory_space<vmem>>, vector<1x128xf32>
    %13 = vector.broadcast %12 : vector<1x128xf32> to vector<16x128xf32>
    %14 = arith.addf %11, %13 : vector<16x128xf32>
    %cst_8 = arith.constant 0.000000e+00 : f32
    %15 = vector.broadcast %cst_8 : f32 to vector<16x128xf32>
    %16 = arith.maximumf %14, %15 : vector<16x128xf32>
    %17 = tpu.iota {dimensions = array<i32: 0>} : vector<16x128xi32>
    %c8_i32 = arith.constant 8 : i32
    %c0_i32 = arith.constant 0 : i32
    %18 = arith.cmpi eq, %c8_i32, %c0_i32 : i32
    %c1_i32 = arith.constant 1 : i32
    %19 = arith.select %18, %c1_i32, %c8_i32 : i32
    %20 = vector.broadcast %19 : i32 to vector<16x128xi32>
    %21 = arith.remsi %17, %20 : vector<16x128xi32>
    %c0_i32_9 = arith.constant 0 : i32
    %22 = vector.broadcast %c0_i32_9 : i32 to vector<16x128xi32>
    %23 = arith.cmpi ne, %21, %22 : vector<16x128xi32>
    %c0_i32_10 = arith.constant 0 : i32
    %24 = vector.broadcast %c0_i32_10 : i32 to vector<16x128xi32>
    %25 = arith.cmpi slt, %21, %24 : vector<16x128xi32>
    %c0_i32_11 = arith.constant 0 : i32
    %26 = arith.cmpi slt, %19, %c0_i32_11 : i32
    %27 = vector.broadcast %26 : i1 to vector<16x128xi1>
    %28 = vector.broadcast %27 : vector<16x128xi1> to vector<16x128xi1>
    %29 = arith.xori %25, %28 : vector<16x128xi1>
    %30 = arith.andi %29, %23 : vector<16x128xi1>
    %31 = vector.broadcast %19 : i32 to vector<16x128xi32>
    %32 = arith.addi %21, %31 : vector<16x128xi32>
    %33 = arith.select %30, %32, %21 : vector<16x128xi1>, vector<16x128xi32>
    %c1_i32_12 = arith.constant 1 : i32
    %34 = tpu.dynamic_rotate %16 by %c1_i32_12 dim 0 : vector<16x128xf32>, i32 -> vector<16x128xf32>
    %c-1_i32 = arith.constant -1 : i32
    %35 = vector.broadcast %c-1_i32 : i32 to vector<16x128xi32>
    %36 = arith.addi %33, %35 : vector<16x128xi32>
    %c0_i32_13 = arith.constant 0 : i32
    %37 = vector.broadcast %c0_i32_13 : i32 to vector<16x128xi32>
    %38 = arith.cmpi sge, %36, %37 : vector<16x128xi32>
    %c-1_i32_14 = arith.constant -1 : i32
    %39 = vector.broadcast %c-1_i32_14 : i32 to vector<16x128xi32>
    %40 = arith.addi %33, %39 : vector<16x128xi32>
    %c8_i32_15 = arith.constant 8 : i32
    %41 = vector.broadcast %c8_i32_15 : i32 to vector<16x128xi32>
    %42 = arith.cmpi slt, %40, %41 : vector<16x128xi32>
    %43 = arith.andi %38, %42 : vector<16x128xi1>
    %cst_16 = arith.constant 0.000000e+00 : f32
    %44 = vector.broadcast %cst_16 : f32 to vector<16x128xf32>
    %45 = arith.select %43, %34, %44 : vector<16x128xi1>, vector<16x128xf32>
    %46 = arith.truncf %45 : vector<16x128xf32> to vector<16x128xbf16>
    %47 = arith.truncf %16 : vector<16x128xf32> to vector<16x128xbf16>
    %c15_i32 = arith.constant 15 : i32
    %48 = tpu.dynamic_rotate %16 by %c15_i32 dim 0 : vector<16x128xf32>, i32 -> vector<16x128xf32>
    %c1_i32_17 = arith.constant 1 : i32
    %49 = vector.broadcast %c1_i32_17 : i32 to vector<16x128xi32>
    %50 = arith.addi %33, %49 : vector<16x128xi32>
    %c0_i32_18 = arith.constant 0 : i32
    %51 = vector.broadcast %c0_i32_18 : i32 to vector<16x128xi32>
    %52 = arith.cmpi sge, %50, %51 : vector<16x128xi32>
    %c1_i32_19 = arith.constant 1 : i32
    %53 = vector.broadcast %c1_i32_19 : i32 to vector<16x128xi32>
    %54 = arith.addi %33, %53 : vector<16x128xi32>
    %c8_i32_20 = arith.constant 8 : i32
    %55 = vector.broadcast %c8_i32_20 : i32 to vector<16x128xi32>
    %56 = arith.cmpi slt, %54, %55 : vector<16x128xi32>
    %57 = arith.andi %52, %56 : vector<16x128xi1>
    %cst_21 = arith.constant 0.000000e+00 : f32
    %58 = vector.broadcast %cst_21 : f32 to vector<16x128xf32>
    %59 = arith.select %57, %48, %58 : vector<16x128xi1>, vector<16x128xf32>
    %60 = arith.truncf %59 : vector<16x128xf32> to vector<16x128xbf16>
    %61 = tpu.concatenate %46, %47, %60 in 1 : vector<16x128xbf16>, vector<16x128xbf16>, vector<16x128xbf16> -> vector<16x384xbf16>
    %c0_22 = arith.constant 0 : index
    %c0_23 = arith.constant 0 : index
    %62 = vector.load %arg5[%c0_22, %c0_23] : memref<384x128xbf16, #tpu.memory_space<vmem>>, vector<384x128xbf16>
    %cst_24 = arith.constant dense<0.000000e+00> : vector<16x128xf32>
    %63 = tpu.matmul %61, %62, %cst_24 {dimension_numbers = #tpu.dot_dimension_numbers<[1], [0], [0], [1], [0, 0, 1, 1], [], []>} : vector<16x384xbf16>, vector<384x128xbf16>, vector<16x128xf32> -> vector<16x128xf32>
    %c0_25 = arith.constant 0 : index
    %c0_26 = arith.constant 0 : index
    %64 = vector.load %arg6[%c0_25, %c0_26] : memref<1x128xf32, #tpu.memory_space<vmem>>, vector<1x128xf32>
    %65 = vector.broadcast %64 : vector<1x128xf32> to vector<16x128xf32>
    %66 = arith.mulf %63, %65 : vector<16x128xf32>
    %c0_27 = arith.constant 0 : index
    %c0_28 = arith.constant 0 : index
    %67 = vector.load %arg7[%c0_27, %c0_28] : memref<1x128xf32, #tpu.memory_space<vmem>>, vector<1x128xf32>
    %68 = vector.broadcast %67 : vector<1x128xf32> to vector<16x128xf32>
    %69 = arith.addf %66, %68 : vector<16x128xf32>
    %70 = vector.shape_cast %69 : vector<16x128xf32> to vector<2x8x128xf32>
    %cst_29 = arith.constant dense<0.000000e+00> : vector<2x128xf32>
    %71 = vector.multi_reduction <add>, %70, %cst_29 [1] : vector<2x8x128xf32> to vector<2x128xf32>
    %cst_30 = arith.constant 8.000000e+00 : f32
    %72 = vector.broadcast %cst_30 : f32 to vector<2x128xf32>
    %73 = arith.divf %71, %72 : vector<2x128xf32>
    %74 = arith.truncf %73 : vector<2x128xf32> to vector<2x128xbf16>
    %c0_31 = arith.constant 0 : index
    %c0_32 = arith.constant 0 : index
    %75 = vector.load %arg8[%c0_31, %c0_32] : memref<128x2xbf16, #tpu.memory_space<vmem>>, vector<128x2xbf16>
    %cst_33 = arith.constant dense<0.000000e+00> : vector<2x2xf32>
    %76 = tpu.matmul %74, %75, %cst_33 {dimension_numbers = #tpu.dot_dimension_numbers<[1], [0], [0], [1], [0, 0, 1, 1], [], []>} : vector<2x128xbf16>, vector<128x2xbf16>, vector<2x2xf32> -> vector<2x2xf32>
    %cst_34 = arith.constant 0.000000e+00 : f32
    %77 = vector.broadcast %cst_34 : f32 to vector<2x2xf32>
    %78 = arith.maximumf %76, %77 : vector<2x2xf32>
    %79 = arith.truncf %78 : vector<2x2xf32> to vector<2x2xbf16>
    %c0_35 = arith.constant 0 : index
    %c0_36 = arith.constant 0 : index
    %80 = vector.load %arg9[%c0_35, %c0_36] : memref<2x128xbf16, #tpu.memory_space<vmem>>, vector<2x128xbf16>
    %cst_37 = arith.constant dense<0.000000e+00> : vector<2x128xf32>
    %81 = tpu.matmul %79, %80, %cst_37 {dimension_numbers = #tpu.dot_dimension_numbers<[1], [0], [0], [1], [0, 0, 1, 1], [], []>} : vector<2x2xbf16>, vector<2x128xbf16>, vector<2x128xf32> -> vector<2x128xf32>
    %82 = arith.negf %81 : vector<2x128xf32>
    %83 = math.exp %82 : vector<2x128xf32>
    %cst_38 = arith.constant 1.000000e+00 : f32
    %84 = vector.broadcast %cst_38 : f32 to vector<2x128xf32>
    %85 = arith.addf %84, %83 : vector<2x128xf32>
    %86 = arith.divf %84, %85 : vector<2x128xf32>
    %87 = vector.shape_cast %86 : vector<2x128xf32> to vector<2x1x128xf32>
    %88 = vector.broadcast %87 : vector<2x1x128xf32> to vector<2x8x128xf32>
    %89 = arith.mulf %70, %88 : vector<2x8x128xf32>
    %c0_39 = arith.constant 0 : index
    %c0_40 = arith.constant 0 : index
    %c0_41 = arith.constant 0 : index
    %90 = vector.load %arg10[%c0_39, %c0_40, %c0_41] : memref<2x8x8xbf16, #tpu.memory_space<vmem>>, vector<2x8x8xbf16>
    %91 = arith.extf %90 : vector<2x8x8xbf16> to vector<2x8x8xf32>
    %92 = vector.shape_cast %91 : vector<2x8x8xf32> to vector<16x8xf32>
    %93 = arith.truncf %92 : vector<16x8xf32> to vector<16x8xbf16>
    %c0_42 = arith.constant 0 : index
    %c0_43 = arith.constant 0 : index
    %94 = vector.load %arg11[%c0_42, %c0_43] : memref<8x128xbf16, #tpu.memory_space<vmem>>, vector<8x128xbf16>
    %cst_44 = arith.constant dense<0.000000e+00> : vector<16x128xf32>
    %95 = tpu.matmul %93, %94, %cst_44 {dimension_numbers = #tpu.dot_dimension_numbers<[1], [0], [0], [1], [0, 0, 1, 1], [], []>} : vector<16x8xbf16>, vector<8x128xbf16>, vector<16x128xf32> -> vector<16x128xf32>
    %c0_45 = arith.constant 0 : index
    %c0_46 = arith.constant 0 : index
    %96 = vector.load %arg12[%c0_45, %c0_46] : memref<1x128xf32, #tpu.memory_space<vmem>>, vector<1x128xf32>
    %97 = vector.broadcast %96 : vector<1x128xf32> to vector<16x128xf32>
    %98 = arith.mulf %95, %97 : vector<16x128xf32>
    %c0_47 = arith.constant 0 : index
    %c0_48 = arith.constant 0 : index
    %99 = vector.load %arg13[%c0_47, %c0_48] : memref<1x128xf32, #tpu.memory_space<vmem>>, vector<1x128xf32>
    %100 = vector.broadcast %99 : vector<1x128xf32> to vector<16x128xf32>
    %101 = arith.addf %98, %100 : vector<16x128xf32>
    %102 = vector.shape_cast %101 : vector<16x128xf32> to vector<2x8x128xf32>
    %103 = arith.addf %89, %102 : vector<2x8x128xf32>
    %cst_49 = arith.constant 0.000000e+00 : f32
    %104 = vector.broadcast %cst_49 : f32 to vector<2x8x128xf32>
    %105 = arith.maximumf %103, %104 : vector<2x8x128xf32>
    %c0_50 = arith.constant 0 : index
    %c0_51 = arith.constant 0 : index
    %c0_52 = arith.constant 0 : index
    %106 = vector.load %arg14[%c0_50, %c0_51, %c0_52] : memref<2x8x128xf32, #tpu.memory_space<vmem>>, vector<2x8x128xf32>
    tpu.vector_store %arg14[%c0_50, %c0_51, %c0_52], %105 {strides = array<i32>} : memref<2x8x128xf32, #tpu.memory_space<vmem>>, vector<2x8x128xf32>,
    return
  }
  func.func @transform_0(%arg0: i32) -> (i32, i32, i32) {
    %c0_i32 = arith.constant 0 : i32
    %c0_i32_0 = arith.constant 0 : i32
    %c0_i32_1 = arith.constant 0 : i32
    return %arg0, %c0_i32, %c0_i32_0 : i32, i32, i32
  }
  func.func @transform_1(%arg0: i32) -> (i32, i32) {
    %c0_i32 = arith.constant 0 : i32
    %c0_i32_0 = arith.constant 0 : i32
    %c0_i32_1 = arith.constant 0 : i32
    return %c0_i32, %c0_i32_0 : i32, i32
  }
  func.func @transform_2(%arg0: i32) -> (i32, i32) {
    %c0_i32 = arith.constant 0 : i32
    %c0_i32_0 = arith.constant 0 : i32
    %c0_i32_1 = arith.constant 0 : i32
    return %c0_i32, %c0_i32_0 : i32, i32
  }
  func.func @transform_3(%arg0: i32) -> (i32, i32) {
    %c0_i32 = arith.constant 0 : i32
    %c0_i32_0 = arith.constant 0 : i32
    %c0_i32_1 = arith.constant 0 : i32
    return %c0_i32, %c0_i32_0 : i32, i32
  }
  func.func @transform_4(%arg0: i32) -> (i32, i32) {
    %c0_i32 = arith.constant 0 : i32
    %c0_i32_0 = arith.constant 0 : i32
    %c0_i32_1 = arith.constant 0 : i32
    return %c0_i32, %c0_i32_0 : i32, i32
  }
  func.func @transform_5(%arg0: i32) -> (i32, i32) {
    %c0_i32 = arith.constant 0 : i32
    %c0_i32_0 = arith.constant 0 : i32
    %c0_i32_1 = arith.constant 0 : i32
    return %c0_i32, %c0_i32_0 : i32, i32
  }
  func.func @transform_6(%arg0: i32) -> (i32, i32) {
    %c0_i32 = arith.constant 0 : i32
    %c0_i32_0 = arith.constant 0 : i32
    %c0_i32_1 = arith.constant 0 : i32
    return %c0_i32, %c0_i32_0 : i32, i32
  }
  func.func @transform_7(%arg0: i32) -> (i32, i32) {
    %c0_i32 = arith.constant 0 : i32
    %c0_i32_0 = arith.constant 0 : i32
    %c0_i32_1 = arith.constant 0 : i32
    return %c0_i32, %c0_i32_0 : i32, i32
  }
  func.func @transform_8(%arg0: i32) -> (i32, i32) {
    %c0_i32 = arith.constant 0 : i32
    %c0_i32_0 = arith.constant 0 : i32
    %c0_i32_1 = arith.constant 0 : i32
    return %c0_i32, %c0_i32_0 : i32, i32
  }
  func.func @transform_9(%arg0: i32) -> (i32, i32, i32) {
    %c0_i32 = arith.constant 0 : i32
    %c0_i32_0 = arith.constant 0 : i32
    %c0_i32_1 = arith.constant 0 : i32
    return %arg0, %c0_i32, %c0_i32_0 : i32, i32, i32
  }
  func.func @transform_10(%arg0: i32) -> (i32, i32) {
    %c0_i32 = arith.constant 0 : i32
    %c0_i32_0 = arith.constant 0 : i32
    %c0_i32_1 = arith.constant 0 : i32
    return %c0_i32, %c0_i32_0 : i32, i32
  }
  func.func @transform_11(%arg0: i32) -> (i32, i32) {
    %c0_i32 = arith.constant 0 : i32
    %c0_i32_0 = arith.constant 0 : i32
    %c0_i32_1 = arith.constant 0 : i32
    return %c0_i32, %c0_i32_0 : i32, i32
  }
  func.func @transform_12(%arg0: i32) -> (i32, i32) {
    %c0_i32 = arith.constant 0 : i32
    %c0_i32_0 = arith.constant 0 : i32
    %c0_i32_1 = arith.constant 0 : i32
    return %c0_i32, %c0_i32_0 : i32, i32
  }
  func.func @transform_13(%arg0: i32) -> (i32, i32, i32) {
    %c0_i32 = arith.constant 0 : i32
    %c0_i32_0 = arith.constant 0 : i32
    %c0_i32_1 = arith.constant 0 : i32
    return %arg0, %c0_i32, %c0_i32_0 : i32, i32, i32
  }
}

</mosaic_0001>

<llo_original>
// kernel: tpu_custom_call.1
$region0: #{tpu_custom_call.1}
  #allocation0 [shape = 'u32[]', space=smem, size = 0x4, offset = 0x4, fixed_abs, tag = 'smem constant byte address 0x4 - core index']
  #allocation1 [shape = 'u32[144,128]{1,0:T(1,128)}', space=vmem, size = 0x12000, scoped, tag = 'internal scratch']
  %s0 = inlined_call_operand.vmem [shape: bf16[2,9,16], index: 0, kind: input, shape index: {}]
  %s1 = inlined_call_operand.vmem [shape: bf16[32,128], index: 1, kind: input, shape index: {}]
  %s2 = inlined_call_operand.vmem [shape: f32[1,128], index: 2, kind: input, shape index: {}]
  %s3 = inlined_call_operand.vmem [shape: f32[1,128], index: 3, kind: input, shape index: {}]
  %s4 = inlined_call_operand.hbm [shape: bf16[384,128], index: 4, kind: input, shape index: {}]
  %s5 = inlined_call_operand.vmem [shape: f32[1,128], index: 5, kind: input, shape index: {}]
  %s6 = inlined_call_operand.vmem [shape: f32[1,128], index: 6, kind: input, shape index: {}]
  %s7 = inlined_call_operand.vmem [shape: bf16[128,2], index: 7, kind: input, shape index: {}]
  %s8 = inlined_call_operand.vmem [shape: bf16[2,128], index: 8, kind: input, shape index: {}]
  %s9 = inlined_call_operand.vmem [shape: bf16[2,8,8], index: 9, kind: input, shape index: {}]
  %s10 = inlined_call_operand.vmem [shape: bf16[8,128], index: 10, kind: input, shape index: {}]
  %s11 = inlined_call_operand.vmem [shape: f32[1,128], index: 11, kind: input, shape index: {}]
  %s12 = inlined_call_operand.vmem [shape: f32[1,128], index: 12, kind: input, shape index: {}]
  %s13 = inlined_call_operand.hbm [shape: f32[2,8,128], index: 13, kind: output, shape index: {}]
  %s14 = sld [smem:[#allocation0]]
  $region66: #{tpu_custom_call.1} parent=0
    _
  %s16 = ssub.s32 1, %s14
  %s17 = scalar_select 0, %s16, %s14
  $region1: #{tpu_custom_call.1} parent=0
    #allocation2 [shape = 'u8[98304]{0}', space=vmem, size = 0x18000, scoped, tag = 'input window, operand 4, single buffered']
    #allocation3 [shape = 's32[1]{0}', space=sflag, size = 0x4, scoped, tag = 'scoped memory for tpu_custom_call.1']
    #allocation4 [shape = 's32[1]{0}', space=sflag, size = 0x4, scoped, tag = 'scoped memory for tpu_custom_call.1']
    #allocation5 [shape = 'u8[8192]{0}', space=vmem, size = 0x2000, scoped, tag = 'output window, operand 0, single buffered']
    %18 = vsyncpa [#allocation3], 0
    %19 = vsyncpa [#allocation4], 0
    // Predicated region
    $region2: #{tpu_custom_call.1} parent=1 // pred_check
      _
    $region3: #{tpu_custom_call.1} parent=1 // pred_check_branch
      %21 = sbr.rel (0) target = $region5
    $region4: #{tpu_custom_call.1} parent=1 // pred_region
      _
    $region5: #{tpu_custom_call.1} parent=1 // pred_fallthru
      _
    // Predicated region
    $region6: #{tpu_custom_call.1} parent=1 // pred_check
      _
    $region7: #{tpu_custom_call.1} parent=1 // pred_check_branch
      %23 = sbr.rel (0) target = $region9
    $region8: #{tpu_custom_call.1} parent=1 // pred_region
      _
    $region9: #{tpu_custom_call.1} parent=1 // pred_fallthru
      _
    // Predicated region
    $region10: #{tpu_custom_call.1} parent=1 // pred_check
      _
    $region11: #{tpu_custom_call.1} parent=1 // pred_check_branch
      %25 = sbr.rel (0) target = $region13
    $region12: #{tpu_custom_call.1} parent=1 // pred_region
      _
    $region13: #{tpu_custom_call.1} parent=1 // pred_fallthru
      _
    // Predicated region
    $region14: #{tpu_custom_call.1} parent=1 // pred_check
      _
    $region15: #{tpu_custom_call.1} parent=1 // pred_check_branch
      %27 = sbr.rel (0) target = $region17
    $region16: #{tpu_custom_call.1} parent=1 // pred_region
      _
    $region17: #{tpu_custom_call.1} parent=1 // pred_fallthru
      _
    // Predicated region
    $region18: #{tpu_custom_call.1} parent=1 // pred_check
      _
    $region19: #{tpu_custom_call.1} parent=1 // pred_check_branch
      %29 = sbr.rel (0) target = $region21
    $region20: #{tpu_custom_call.1} parent=1 // pred_region
      %s31 = ssub.s32 3072, 3072
      %32 = vsyncadd [#allocation3], %s31
      %s33 = sshll.u32 [#allocation2], 4
      %s34 = int_to_ptr.vmem [resolvable:$true] %s33
      %39 = dma.hbm_to_vmem [thread:$0]  %s4, 3072, %s34, [#allocation3], 64, 64, 4
    $region21: #{tpu_custom_call.1} parent=1 // pred_fallthru
      _
    // Predicated region
    $region22: #{tpu_custom_call.1} parent=1 // pred_check
      _
    $region23: #{tpu_custom_call.1} parent=1 // pred_check_branch
      %41 = sbr.rel (0) target = $region25
    $region24: #{tpu_custom_call.1} parent=1 // pred_region
      _
    $region25: #{tpu_custom_call.1} parent=1 // pred_fallthru
      _
    // Predicated region
    $region26: #{tpu_custom_call.1} parent=1 // pred_check
      _
    $region27: #{tpu_custom_call.1} parent=1 // pred_check_branch
      %43 = sbr.rel (0) target = $region29
    $region28: #{tpu_custom_call.1} parent=1 // pred_region
      _
    $region29: #{tpu_custom_call.1} parent=1 // pred_fallthru
      _
    // Predicated region
    $region30: #{tpu_custom_call.1} parent=1 // pred_check
      _
    $region31: #{tpu_custom_call.1} parent=1 // pred_check_branch
      %45 = sbr.rel (0) target = $region33
    $region32: #{tpu_custom_call.1} parent=1 // pred_region
      _
    $region33: #{tpu_custom_call.1} parent=1 // pred_fallthru
      _
    // Predicated region
    $region34: #{tpu_custom_call.1} parent=1 // pred_check
      _
    $region35: #{tpu_custom_call.1} parent=1 // pred_check_branch
      %47 = sbr.rel (0) target = $region37
    $region36: #{tpu_custom_call.1} parent=1 // pred_region
      _
    $region37: #{tpu_custom_call.1} parent=1 // pred_fallthru
      _
    // Predicated region
    $region38: #{tpu_custom_call.1} parent=1 // pred_check
      _
    $region39: #{tpu_custom_call.1} parent=1 // pred_check_branch
      %49 = sbr.rel (0) target = $region41
    $region40: #{tpu_custom_call.1} parent=1 // pred_region
      _
    $region41: #{tpu_custom_call.1} parent=1 // pred_fallthru
      _
    // Predicated region
    $region42: #{tpu_custom_call.1} parent=1 // pred_check
      _
    $region43: #{tpu_custom_call.1} parent=1 // pred_check_branch
      %51 = sbr.rel (0) target = $region45
    $region44: #{tpu_custom_call.1} parent=1 // pred_region
      _
    $region45: #{tpu_custom_call.1} parent=1 // pred_fallthru
      _
    // Predicated region
    $region46: #{tpu_custom_call.1} parent=1 // pred_check
      _
    $region47: #{tpu_custom_call.1} parent=1 // pred_check_branch
      %53 = sbr.rel (0) target = $region49
    $region48: #{tpu_custom_call.1} parent=1 // pred_region
      _
    $region49: #{tpu_custom_call.1} parent=1 // pred_fallthru
      _
    // Predicated region
    $region50: #{tpu_custom_call.1} parent=1 // pred_check
      _
    $region51: #{tpu_custom_call.1} parent=1 // pred_check_branch
      %55 = sbr.rel (0) target = $region53
    $region52: #{tpu_custom_call.1} parent=1 // pred_region
      _
    $region53: #{tpu_custom_call.1} parent=1 // pred_fallthru
      _
    // Predicated region
    $region54: #{tpu_custom_call.1} parent=1 // pred_check
      _
    $region55: #{tpu_custom_call.1} parent=1 // pred_check_branch
      %57 = sbr.rel (0) target = $region57
    $region56: #{tpu_custom_call.1} parent=1 // pred_region
      %58 = dma.done [#allocation3], 3072
    $region57: #{tpu_custom_call.1} parent=1 // pred_fallthru
      _
    %v60 = vld [vmem:[%s0] sm:$0xf]
    %v61 = vld [vmem:[%s0 + $0x4] sm:$0x1]
    %v62 = vld [vmem:[%s0 + $0x8] sm:$0xf]
    %v63 = vld [vmem:[%s0 + $0xc] sm:$0x1]
    %v64 = vunpack.c.l.bf16 %v60
    %v65 = vunpack.c.l.bf16 %v61
    %v66 = vunpack.c.l.bf16 %v62
    %v67 = vunpack.c.l.bf16 %v63
    %vm72 = vcmask 1046528
    %v73 = vrot.slane %v64, 1
    %v74 = vrot.slane %v65, 1
    %v75 = vsel %vm72, %v73, %v74
    %v76 = vrot.slane %v66, 1
    %v77 = vrot.slane %v67, 1
    %v78 = vsel %vm72, %v76, %v77
    %79 = vrot.lane.b32.xlu0 %v75, 16
    %v80 = vpop.permute.xlu0 %79
    %81 = vrot.lane.b32.xlu0 %v78, 16
    %v82 = vpop.permute.xlu0 %81
    %vm85 = vcmask 130048
    %v86 = vsel %vm85, %v64, %v80
    %v87 = vsel %vm85, %v66, %v82
    %v88 = vpack.c.bf16 %v87, %v86
    %v89 = vld [vmem:[%s1] sm:$0xf]
    %v90 = vld [vmem:[%s1 + $0x4] sm:$0xf]
    %v91 = vld [vmem:[%s1 + $0x8] sm:$0xf]
    %v92 = vld [vmem:[%s1 + $0xc] sm:$0xf]
    %v97 = vunpack.c.l.b16 %v89
    %v98 = vunpack.c.l.b16 %v90
    %v99 = vunpack.c.l.b16 %v91
    %v100 = vunpack.c.l.b16 %v92
    %v101 = vpack.c.b16 %v98, %v97
    %v102 = vpack.c.b16 %v100, %v99
    %vm105 = vcmask 261120
    %v107 = vsel %vm105, %v88, 0
    %109 = vmatprep.subr.bf16.mxu0 0
    %110 = vmatpush1.bf16.msra.mxu0 %v101
    %111 = vmatprep.subr.bf16.mxu0 0
    %112 = vmatpush1.bf16.msra.mxu0 %v102
    %113 = vmatprep.subr.bf16.mxu0 0
    %114 = vmatpush1.bf16.msra.mxu0 0
    %115 = vmatprep.subr.bf16.mxu0 0
    %116 = vmatpush1.bf16.msra.mxu0 0
    %117 = vmatprep.subr.bf16.mxu0 0
    %118 = vmatpush1.bf16.msra.mxu0 0
    %119 = vmatprep.subr.bf16.mxu0 0
    %120 = vmatpush1.bf16.msra.mxu0 0
    %121 = vmatprep.subr.bf16.mxu0 0
    %122 = vmatpush1.bf16.msra.mxu0 0
    %123 = vmatprep.subr.bf16.mxu0 0
    %124 = vmatpush1.bf16.msra.mxu0 0
    %125 = vmatprep.subr.bf16.mxu0 0
    %126 = vmatpush1.bf16.msra.mxu0 0
    %127 = vmatprep.subr.bf16.mxu0 0
    %128 = vmatpush1.bf16.msra.mxu0 0
    %129 = vmatprep.subr.bf16.mxu0 0
    %130 = vmatpush1.bf16.msra.mxu0 0
    %131 = vmatprep.subr.bf16.mxu0 0
    %132 = vmatpush1.bf16.msra.mxu0 0
    %133 = vmatprep.subr.bf16.mxu0 0
    %134 = vmatpush1.bf16.msra.mxu0 0
    %135 = vmatprep.subr.bf16.mxu0 0
    %136 = vmatpush1.bf16.msra.mxu0 0
    %137 = vmatprep.subr.bf16.mxu0 0
    %138 = vmatpush1.bf16.msra.mxu0 0
    %139 = vmatprep.subr.bf16.mxu0 0
    %140 = vmatpush1.bf16.msra.mxu0 0
    %141 = vmatprep.mubr.bf16.mxu0 0
    %142 = vmatmul.mubr.bf16.gmra.mrb[0].mxu0 %v107
    %v143 = vpop.f32.mrb[0].mxu0
    %v144 = vadd.f32 0.0, %v143
    %v145 = vpop.f32.mrb[0].mxu0
    %v146 = vpop.f32.mrb[0].mxu0
    %v147 = vadd.f32 0.0, %v146
    %v148 = vpop.f32.mrb[0].mxu0
    %149 = vdwg.mxu0
    %v150 = vld [vmem:[%s2] sm:$0x1]
    %v152 = vlaneseq
    %v153 = vshrl.u32 %v152, 7
    %v154 = vsub.s32 0, %v153
    %v155 = vrot.slane %v150, %v154
    %v157 = vmul.f32 %v144, %v155
    %v158 = vmul.f32 %v147, %v155
    %v159 = vld [vmem:[%s3] sm:$0x1]
    %v161 = vlaneseq
    %v162 = vshrl.u32 %v161, 7
    %v163 = vsub.s32 0, %v162
    %v164 = vrot.slane %v159, %v163
    %v166 = vadd.f32 %v157, %v164
    %v167 = vadd.f32 %v158, %v164
    %v168 = vmax.f32 %v166, 0.0
    %v169 = vmax.f32 %v167, 0.0
    %v170 = vlaneseq
    %v171 = vshrl.u32 %v170, 7
    %v172 = vadd.s32 %v171, 8
    %vm173 = vcmp.lt.s32.totalorder %v171, 0
    %v174 = vsub.s32 0, %v171
    %v175 = vsel %vm173, %v174, %v171
    %v176 = vshrl.u32 %v175, 3
    %v177 = vand.u32 %v175, 7
    %v178 = vsub.s32 0, %v177
    %v179 = vsel %vm173, %v178, %v177
    %vm180 = vcmp.lt.s32.totalorder %v172, 0
    %v181 = vsub.s32 0, %v172
    %v182 = vsel %vm180, %v181, %v172
    %v183 = vshrl.u32 %v182, 3
    %v184 = vand.u32 %v182, 7
    %v185 = vsub.s32 0, %v184
    %v186 = vsel %vm180, %v185, %v184
    %vm187 = vcmp.ne.s32.totalorder %v179, 0
    %vm188 = vcmp.ne.s32.totalorder %v186, 0
    %vm189 = vcmp.lt.s32.totalorder %v179, 0
    %vm190 = vcmp.lt.s32.totalorder %v186, 0
    %vm191 = vmand %vm189, %vm187
    %vm192 = vmand %vm190, %vm188
    %v193 = vadd.s32 %v179, 8
    %v194 = vadd.s32 %v186, 8
    %v195 = vsel %vm191, %v193, %v179
    %v196 = vsel %vm192, %v194, %v186
    %v197 = vrot.slane %v168, 7
    %v198 = vrot.slane %v169, 7
    %vm199 = vcmp.lt.s32.totalorder %v171, 1
    %v200 = vsel %vm199, %v197, %v198
    %v201 = vsel %vm199, %v198, %v197
    %v202 = vadd.s32 %v195, 4294967295
    %v203 = vadd.s32 %v196, 4294967295
    %vm204 = vcmp.ge.s32.totalorder %v202, 0
    %vm205 = vcmp.ge.s32.totalorder %v203, 0
    %vm206 = vcmp.lt.s32.totalorder %v202, 8
    %vm207 = vcmp.lt.s32.totalorder %v203, 8
    %vm208 = vmand %vm204, %vm206
    %vm209 = vmand %vm205, %vm207
    %v210 = vsel %vm208, %v201, 0.0
    %v211 = vsel %vm209, %v200, 0.0
    %v212 = vpack.c.bf16 %v211, %v210
    %v213 = vpack.c.bf16 %v169, %v168
    %v214 = vrot.slane %v168, 1
    %v215 = vrot.slane %v169, 1
    %vm216 = vcmp.lt.s32.totalorder %v171, 7
    %v217 = vsel %vm216, %v214, %v215
    %v218 = vsel %vm216, %v215, %v214
    %v219 = vadd.s32 %v195, 1
    %v220 = vadd.s32 %v196, 1
    %vm221 = vcmp.ge.s32.totalorder %v219, 0
    %vm222 = vcmp.ge.s32.totalorder %v220, 0
    %vm223 = vcmp.lt.s32.totalorder %v219, 8
    %vm224 = vcmp.lt.s32.totalorder %v220, 8
    %vm225 = vmand %vm221, %vm223
    %vm226 = vmand %vm222, %vm224
    %v227 = vsel %vm225, %v217, 0.0
    %v228 = vsel %vm226, %v218, 0.0
    %v229 = vpack.c.bf16 %v228, %v227
    %v230 = vld [vmem:[#allocation2] sm:$0xf]
    %v231 = vld [vmem:[#allocation2 + $0x4] sm:$0xf]
    %v232 = vld [vmem:[#allocation2 + $0x8] sm:$0xf]
    %v233 = vld [vmem:[#allocation2 + $0xc] sm:$0xf]
    %v234 = vld [vmem:[#allocation2 + $0x10] sm:$0xf]
    %v235 = vld [vmem:[#allocation2 + $0x14] sm:$0xf]
    %v236 = vld [vmem:[#allocation2 + $0x18] sm:$0xf]
    %v237 = vld [vmem:[#allocation2 + $0x1c] sm:$0xf]
    %v238 = vld [vmem:[#allocation2 + $0x20] sm:$0xf]
    %v239 = vld [vmem:[#allocation2 + $0x24] sm:$0xf]
    %v240 = vld [vmem:[#allocation2 + $0x28] sm:$0xf]
    %v241 = vld [vmem:[#allocation2 + $0x2c] sm:$0xf]
    %v242 = vld [vmem:[#allocation2 + $0x30] sm:$0xf]
    %v243 = vld [vmem:[#allocation2 + $0x34] sm:$0xf]
    %v244 = vld [vmem:[#allocation2 + $0x38] sm:$0xf]
    %v245 = vld [vmem:[#allocation2 + $0x3c] sm:$0xf]
    %v246 = vld [vmem:[#allocation2 + $0x40] sm:$0xf]
    %v247 = vld [vmem:[#allocation2 + $0x44] sm:$0xf]
    %v248 = vld [vmem:[#allocation2 + $0x48] sm:$0xf]
    %v249 = vld [vmem:[#allocation2 + $0x4c] sm:$0xf]
    %v250 = vld [vmem:[#allocation2 + $0x50] sm:$0xf]
    %v251 = vld [vmem:[#allocation2 + $0x54] sm:$0xf]
    %v252 = vld [vmem:[#allocation2 + $0x58] sm:$0xf]
    %v253 = vld [vmem:[#allocation2 + $0x5c] sm:$0xf]
    %v254 = vld [vmem:[#allocation2 + $0x60] sm:$0xf]
    %v255 = vld [vmem:[#allocation2 + $0x64] sm:$0xf]
    %v256 = vld [vmem:[#allocation2 + $0x68] sm:$0xf]
    %v257 = vld [vmem:[#allocation2 + $0x6c] sm:$0xf]
    %v258 = vld [vmem:[#allocation2 + $0x70] sm:$0xf]
    %v259 = vld [vmem:[#allocation2 + $0x74] sm:$0xf]
    %v260 = vld [vmem:[#allocation2 + $0x78] sm:$0xf]
    %v261 = vld [vmem:[#allocation2 + $0x7c] sm:$0xf]
    %v262 = vld [vmem:[#allocation2 + $0x80] sm:$0xf]
    %v263 = vld [vmem:[#allocation2 + $0x84] sm:$0xf]
    %v264 = vld [vmem:[#allocation2 + $0x88] sm:$0xf]
    %v265 = vld [vmem:[#allocation2 + $0x8c] sm:$0xf]
    %v266 = vld [vmem:[#allocation2 + $0x90] sm:$0xf]
    %v267 = vld [vmem:[#allocation2 + $0x94] sm:$0xf]
    %v268 = vld [vmem:[#allocation2 + $0x98] sm:$0xf]
    %v269 = vld [vmem:[#allocation2 + $0x9c] sm:$0xf]
    %v270 = vld [vmem:[#allocation2 + $0xa0] sm:$0xf]
    %v271 = vld [vmem:[#allocation2 + $0xa4] sm:$0xf]
    %v272 = vld [vmem:[#allocation2 + $0xa8] sm:$0xf]
    %v273 = vld [vmem:[#allocation2 + $0xac] sm:$0xf]
    %v274 = vld [vmem:[#allocation2 + $0xb0] sm:$0xf]
    %v275 = vld [vmem:[#allocation2 + $0xb4] sm:$0xf]
    %v276 = vld [vmem:[#allocation2 + $0xb8] sm:$0xf]
    %v277 = vld [vmem:[#allocation2 + $0xbc] sm:$0xf]
    %v326 = vunpack.c.l.b16 %v230
    %v327 = vunpack.c.l.b16 %v231
    %v328 = vunpack.c.l.b16 %v232
    %v329 = vunpack.c.l.b16 %v233
    %v330 = vunpack.c.l.b16 %v234
    %v331 = vunpack.c.l.b16 %v235
    %v332 = vunpack.c.l.b16 %v236
    %v333 = vunpack.c.l.b16 %v237
    %v334 = vunpack.c.l.b16 %v238
    %v335 = vunpack.c.l.b16 %v239
    %v336 = vunpack.c.l.b16 %v240
    %v337 = vunpack.c.l.b16 %v241
    %v338 = vunpack.c.l.b16 %v242
    %v339 = vunpack.c.l.b16 %v243
    %v340 = vunpack.c.l.b16 %v244
    %v341 = vunpack.c.l.b16 %v245
    %v342 = vunpack.c.l.b16 %v246
    %v343 = vunpack.c.l.b16 %v247
    %v344 = vunpack.c.l.b16 %v248
    %v345 = vunpack.c.l.b16 %v249
    %v346 = vunpack.c.l.b16 %v250
    %v347 = vunpack.c.l.b16 %v251
    %v348 = vunpack.c.l.b16 %v252
    %v349 = vunpack.c.l.b16 %v253
    %v350 = vunpack.c.l.b16 %v254
    %v351 = vunpack.c.l.b16 %v255
    %v352 = vunpack.c.l.b16 %v256
    %v353 = vunpack.c.l.b16 %v257
    %v354 = vunpack.c.l.b16 %v258
    %v355 = vunpack.c.l.b16 %v259
    %v356 = vunpack.c.l.b16 %v260
    %v357 = vunpack.c.l.b16 %v261
    %v358 = vunpack.c.l.b16 %v262
    %v359 = vunpack.c.l.b16 %v263
    %v360 = vunpack.c.l.b16 %v264
    %v361 = vunpack.c.l.b16 %v265
    %v362 = vunpack.c.l.b16 %v266
    %v363 = vunpack.c.l.b16 %v267
    %v364 = vunpack.c.l.b16 %v268
    %v365 = vunpack.c.l.b16 %v269
    %v366 = vunpack.c.l.b16 %v270
    %v367 = vunpack.c.l.b16 %v271
    %v368 = vunpack.c.l.b16 %v272
    %v369 = vunpack.c.l.b16 %v273
    %v370 = vunpack.c.l.b16 %v274
    %v371 = vunpack.c.l.b16 %v275
    %v372 = vunpack.c.l.b16 %v276
    %v373 = vunpack.c.l.b16 %v277
    %v374 = vpack.c.b16 %v327, %v326
    %v375 = vpack.c.b16 %v329, %v328
    %v376 = vpack.c.b16 %v331, %v330
    %v377 = vpack.c.b16 %v333, %v332
    %v378 = vpack.c.b16 %v335, %v334
    %v379 = vpack.c.b16 %v337, %v336
    %v380 = vpack.c.b16 %v339, %v338
    %v381 = vpack.c.b16 %v341, %v340
    %v382 = vpack.c.b16 %v343, %v342
    %v383 = vpack.c.b16 %v345, %v344
    %v384 = vpack.c.b16 %v347, %v346
    %v385 = vpack.c.b16 %v349, %v348
    %v386 = vpack.c.b16 %v351, %v350
    %v387 = vpack.c.b16 %v353, %v352
    %v388 = vpack.c.b16 %v355, %v354
    %v389 = vpack.c.b16 %v357, %v356
    %v390 = vpack.c.b16 %v359, %v358
    %v391 = vpack.c.b16 %v361, %v360
    %v392 = vpack.c.b16 %v363, %v362
    %v393 = vpack.c.b16 %v365, %v364
    %v394 = vpack.c.b16 %v367, %v366
    %v395 = vpack.c.b16 %v369, %v368
    %v396 = vpack.c.b16 %v371, %v370
    %v397 = vpack.c.b16 %v373, %v372
    %422 = vmatprep.subr.bf16.mxu0 0
    %423 = vmatpush1.bf16.msra.mxu0 %v374
    %424 = vmatprep.subr.bf16.mxu0 0
    %425 = vmatpush1.bf16.msra.mxu0 %v375
    %426 = vmatprep.subr.bf16.mxu0 0
    %427 = vmatpush1.bf16.msra.mxu0 %v376
    %428 = vmatprep.subr.bf16.mxu0 0
    %429 = vmatpush1.bf16.msra.mxu0 %v377
    %430 = vmatprep.subr.bf16.mxu0 0
    %431 = vmatpush1.bf16.msra.mxu0 %v378
    %432 = vmatprep.subr.bf16.mxu0 0
    %433 = vmatpush1.bf16.msra.mxu0 %v379
    %434 = vmatprep.subr.bf16.mxu0 0
    %435 = vmatpush1.bf16.msra.mxu0 %v380
    %436 = vmatprep.subr.bf16.mxu0 0
    %437 = vmatpush1.bf16.msra.mxu0 %v381
    %438 = vmatprep.subr.bf16.mxu0 0
    %439 = vmatpush1.bf16.msra.mxu0 %v382
    %440 = vmatprep.subr.bf16.mxu0 0
    %441 = vmatpush1.bf16.msra.mxu0 %v383
    %442 = vmatprep.subr.bf16.mxu0 0
    %443 = vmatpush1.bf16.msra.mxu0 %v384
    %444 = vmatprep.subr.bf16.mxu0 0
    %445 = vmatpush1.bf16.msra.mxu0 %v385
    %446 = vmatprep.subr.bf16.mxu0 0
    %447 = vmatpush1.bf16.msra.mxu0 %v386
    %448 = vmatprep.subr.bf16.mxu0 0
    %449 = vmatpush1.bf16.msra.mxu0 %v387
    %450 = vmatprep.subr.bf16.mxu0 0
    %451 = vmatpush1.bf16.msra.mxu0 %v388
    %452 = vmatprep.subr.bf16.mxu0 0
    %453 = vmatpush1.bf16.msra.mxu0 %v389
    %454 = vmatprep.mubr.bf16.mxu0 %v213
    %455 = vmatmul.mubr.bf16.gmra.mrb[0].mxu0 %v212
    %v456 = vpop.f32.mrb[0].mxu0
    %v457 = vadd.f32 0.0, %v456
    %v458 = vpop.f32.mrb[0].mxu0
    %v459 = vpop.f32.mrb[0].mxu0
    %v460 = vadd.f32 0.0, %v459
    %v461 = vpop.f32.mrb[0].mxu0
    %462 = vdwg.mxu0
    %463 = vmatprep.subr.bf16.mxu0 0
    %464 = vmatpush1.bf16.msra.mxu0 %v390
    %465 = vmatprep.subr.bf16.mxu0 0
    %466 = vmatpush1.bf16.msra.mxu0 %v391
    %467 = vmatprep.subr.bf16.mxu0 0
    %468 = vmatpush1.bf16.msra.mxu0 %v392
    %469 = vmatprep.subr.bf16.mxu0 0
    %470 = vmatpush1.bf16.msra.mxu0 %v393
    %471 = vmatprep.subr.bf16.mxu0 0
    %472 = vmatpush1.bf16.msra.mxu0 %v394
    %473 = vmatprep.subr.bf16.mxu0 0
    %474 = vmatpush1.bf16.msra.mxu0 %v395
    %475 = vmatprep.subr.bf16.mxu0 0
    %476 = vmatpush1.bf16.msra.mxu0 %v396
    %477 = vmatprep.subr.bf16.mxu0 0
    %478 = vmatpush1.bf16.msra.mxu0 %v397
    %479 = vmatprep.subr.bf16.mxu0 0
    %480 = vmatpush1.bf16.msra.mxu0 0
    %481 = vmatprep.subr.bf16.mxu0 0
    %482 = vmatpush1.bf16.msra.mxu0 0
    %483 = vmatprep.subr.bf16.mxu0 0
    %484 = vmatpush1.bf16.msra.mxu0 0
    %485 = vmatprep.subr.bf16.mxu0 0
    %486 = vmatpush1.bf16.msra.mxu0 0
    %487 = vmatprep.subr.bf16.mxu0 0
    %488 = vmatpush1.bf16.msra.mxu0 0
    %489 = vmatprep.subr.bf16.mxu0 0
    %490 = vmatpush1.bf16.msra.mxu0 0
    %491 = vmatprep.subr.bf16.mxu0 0
    %492 = vmatpush1.bf16.msra.mxu0 0
    %493 = vmatprep.subr.bf16.mxu0 0
    %494 = vmatpush1.bf16.msra.mxu0 0
    %495 = vmatprep.mubr.bf16.mxu0 0
    %496 = vmatmul.mubr.bf16.gmra.mrb[0].mxu0 %v229
    %v497 = vpop.f32.mrb[0].mxu0
    %v498 = vadd.f32 %v457, %v497
    %v499 = vpop.f32.mrb[0].mxu0
    %v500 = vpop.f32.mrb[0].mxu0
    %v501 = vadd.f32 %v460, %v500
    %v502 = vpop.f32.mrb[0].mxu0
    %503 = vdwg.mxu0
    %v504 = vld [vmem:[%s5] sm:$0x1]
    %v506 = vlaneseq
    %v507 = vshrl.u32 %v506, 7
    %v508 = vsub.s32 0, %v507
    %v509 = vrot.slane %v504, %v508
    %v511 = vmul.f32 %v498, %v509
    %v512 = vmul.f32 %v501, %v509
    %v513 = vld [vmem:[%s6] sm:$0x1]
    %v515 = vlaneseq
    %v516 = vshrl.u32 %v515, 7
    %v517 = vsub.s32 0, %v516
    %v518 = vrot.slane %v513, %v517
    %v520 = vadd.f32 %v511, %v518
    %v521 = vadd.f32 %v512, %v518
    %v522 = vrot.slane %v520, 4
    %v523 = vadd.f32 %v520, %v522
    %v524 = vrot.slane %v523, 2
    %v525 = vadd.f32 %v523, %v524
    %v526 = vrot.slane %v525, 1
    %v527 = vadd.f32 %v525, %v526
    %v528 = vrot.slane %v521, 4
    %v529 = vadd.f32 %v521, %v528
    %v530 = vrot.slane %v529, 2
    %v531 = vadd.f32 %v529, %v530
    %v532 = vrot.slane %v531, 1
    %v533 = vadd.f32 %v531, %v532
    %v534 = vrcp.pop 8.0
    %v535 = vmul.f32 %v527, %v534
    %v536 = vmul.f32 %v533, %v534
    %v537 = vpack.c.bf16 %v535, %v535
    %v538 = vpack.c.bf16 %v536, %v536
    %v539 = vld [vmem:[%s7] sm:$0xf]
    %v540 = vld [vmem:[%s7 + $0x4] sm:$0xf]
    %v541 = vld [vmem:[%s7 + $0x8] sm:$0xf]
    %v542 = vld [vmem:[%s7 + $0xc] sm:$0xf]
    %v543 = vld [vmem:[%s7 + $0x10] sm:$0xf]
    %v544 = vld [vmem:[%s7 + $0x14] sm:$0xf]
    %v545 = vld [vmem:[%s7 + $0x18] sm:$0xf]
    %v546 = vld [vmem:[%s7 + $0x1c] sm:$0xf]
    %v547 = vld [vmem:[%s7 + $0x20] sm:$0xf]
    %v548 = vld [vmem:[%s7 + $0x24] sm:$0xf]
    %v549 = vld [vmem:[%s7 + $0x28] sm:$0xf]
    %v550 = vld [vmem:[%s7 + $0x2c] sm:$0xf]
    %v551 = vld [vmem:[%s7 + $0x30] sm:$0xf]
    %v552 = vld [vmem:[%s7 + $0x34] sm:$0xf]
    %v553 = vld [vmem:[%s7 + $0x38] sm:$0xf]
    %v554 = vld [vmem:[%s7 + $0x3c] sm:$0xf]
    %v557 = vunpack.c.l.b16 %v537
    %v558 = vunpack.c.l.b16 %v538
    %vm559 = vcmask 1041409
    %v560 = vsel %vm559, %v558, %v557
    %v561 = vpack.c.b16 %v560, %v560
    %v579 = vunpack.c.l.b16 %v539
    %v580 = vunpack.c.l.b16 %v540
    %v581 = vunpack.c.l.b16 %v541
    %v582 = vunpack.c.l.b16 %v542
    %v583 = vunpack.c.l.b16 %v543
    %v584 = vunpack.c.l.b16 %v544
    %v585 = vunpack.c.l.b16 %v545
    %v586 = vunpack.c.l.b16 %v546
    %v587 = vunpack.c.l.b16 %v547
    %v588 = vunpack.c.l.b16 %v548
    %v589 = vunpack.c.l.b16 %v549
    %v590 = vunpack.c.l.b16 %v550
    %v591 = vunpack.c.l.b16 %v551
    %v592 = vunpack.c.l.b16 %v552
    %v593 = vunpack.c.l.b16 %v553
    %v594 = vunpack.c.l.b16 %v554
    %v595 = vpack.c.b16 %v580, %v579
    %v596 = vpack.c.b16 %v582, %v581
    %v597 = vpack.c.b16 %v584, %v583
    %v598 = vpack.c.b16 %v586, %v585
    %v599 = vpack.c.b16 %v588, %v587
    %v600 = vpack.c.b16 %v590, %v589
    %v601 = vpack.c.b16 %v592, %v591
    %v602 = vpack.c.b16 %v594, %v593
    %611 = vmatprep.subr.bf16.mxu0 0
    %612 = vmatpush1.bf16.msra.mxu0 %v595
    %613 = vmatprep.subr.bf16.mxu0 0
    %614 = vmatpush1.bf16.msra.mxu0 %v596
    %615 = vmatprep.subr.bf16.mxu0 0
    %616 = vmatpush1.bf16.msra.mxu0 %v597
    %617 = vmatprep.subr.bf16.mxu0 0
    %618 = vmatpush1.bf16.msra.mxu0 %v598
    %619 = vmatprep.subr.bf16.mxu0 0
    %620 = vmatpush1.bf16.msra.mxu0 %v599
    %621 = vmatprep.subr.bf16.mxu0 0
    %622 = vmatpush1.bf16.msra.mxu0 %v600
    %623 = vmatprep.subr.bf16.mxu0 0
    %624 = vmatpush1.bf16.msra.mxu0 %v601
    %625 = vmatprep.subr.bf16.mxu0 0
    %626 = vmatpush1.bf16.msra.mxu0 %v602
    %627 = vmatprep.subr.bf16.mxu0 0
    %628 = vmatpush1.bf16.msra.mxu0 0
    %629 = vmatprep.subr.bf16.mxu0 0
    %630 = vmatpush1.bf16.msra.mxu0 0
    %631 = vmatprep.subr.bf16.mxu0 0
    %632 = vmatpush1.bf16.msra.mxu0 0
    %633 = vmatprep.subr.bf16.mxu0 0
    %634 = vmatpush1.bf16.msra.mxu0 0
    %635 = vmatprep.subr.bf16.mxu0 0
    %636 = vmatpush1.bf16.msra.mxu0 0
    %637 = vmatprep.subr.bf16.mxu0 0
    %638 = vmatpush1.bf16.msra.mxu0 0
    %639 = vmatprep.subr.bf16.mxu0 0
    %640 = vmatpush1.bf16.msra.mxu0 0
    %641 = vmatprep.subr.bf16.mxu0 0
    %642 = vmatpush1.bf16.msra.mxu0 0
    %643 = vmatprep.mubr.bf16.mxu0 0
    %644 = vmatmul.mubr.bf16.gmra.mrb[0].mxu0 %v561
    %v645 = vpop.f32.mrb[0].mxu0
    %v646 = vadd.f32 0.0, %v645
    %v647 = vpop.f32.mrb[0].mxu0
    %v648 = vpop.f32.mrb[0].mxu0
    %v649 = vpop.f32.mrb[0].mxu0
    %650 = vdwg.mxu0
    %v651 = vmax.f32 %v646, 0.0
    %v652 = vpack.c.bf16 %v651, %v651
    %v653 = vld [vmem:[%s8] sm:$0x1]
    %vm654 = vcmask 15360
    %v656 = vsel %vm654, %v652, 0
    %vm658 = vcmask 1040384
    %v660 = vsel %vm658, %v653, 0
    %662 = vmatprep.subr.bf16.mxu0 0
    %663 = vmatpush1.bf16.msra.mxu0 %v660
    %664 = vmatprep.subr.bf16.mxu0 0
    %665 = vmatpush1.bf16.msra.mxu0 0
    %666 = vmatprep.subr.bf16.mxu0 0
    %667 = vmatpush1.bf16.msra.mxu0 0
    %668 = vmatprep.subr.bf16.mxu0 0
    %669 = vmatpush1.bf16.msra.mxu0 0
    %670 = vmatprep.subr.bf16.mxu0 0
    %671 = vmatpush1.bf16.msra.mxu0 0
    %672 = vmatprep.subr.bf16.mxu0 0
    %673 = vmatpush1.bf16.msra.mxu0 0
    %674 = vmatprep.subr.bf16.mxu0 0
    %675 = vmatpush1.bf16.msra.mxu0 0
    %676 = vmatprep.subr.bf16.mxu0 0
    %677 = vmatpush1.bf16.msra.mxu0 0
    %678 = vmatprep.subr.bf16.mxu0 0
    %679 = vmatpush1.bf16.msra.mxu0 0
    %680 = vmatprep.subr.bf16.mxu0 0
    %681 = vmatpush1.bf16.msra.mxu0 0
    %682 = vmatprep.subr.bf16.mxu0 0
    %683 = vmatpush1.bf16.msra.mxu0 0
    %684 = vmatprep.subr.bf16.mxu0 0
    %685 = vmatpush1.bf16.msra.mxu0 0
    %686 = vmatprep.subr.bf16.mxu0 0
    %687 = vmatpush1.bf16.msra.mxu0 0
    %688 = vmatprep.subr.bf16.mxu0 0
    %689 = vmatpush1.bf16.msra.mxu0 0
    %690 = vmatprep.subr.bf16.mxu0 0
    %691 = vmatpush1.bf16.msra.mxu0 0
    %692 = vmatprep.subr.bf16.mxu0 0
    %693 = vmatpush1.bf16.msra.mxu0 0
    %694 = vmatprep.mubr.bf16.mxu0 0
    %695 = vmatmul.mubr.bf16.gmra.mrb[0].mxu0 %v656
    %v696 = vpop.f32.mrb[0].mxu0
    %v697 = vadd.f32 0.0, %v696
    %v698 = vpop.f32.mrb[0].mxu0
    %v699 = vpop.f32.mrb[0].mxu0
    %v700 = vpop.f32.mrb[0].mxu0
    %701 = vdwg.mxu0
    %v702 = vxor.u32 %v697, 2147483648
    %v703 = vmul.f32 %v702, 1.442695
    %v704 = vpow.pop %v703
    %v705 = vadd.f32 %v704, 1.0
    %v706 = vrcp.pop %v705
    %v707 = vmul.f32 1.0, %v706
    %v710 = vunpack.c.l.s4 1966171168
    %v711 = vunpack.c.0.s8 %v710
    %v712 = vlaneseq
    %v713 = vshrl.u32 %v712, 7
    %v714 = vsub.s32 %v711, %v713
    %v715 = vrot.slane %v707, %v714
    %v716 = vcombine.high %v715, %v715
    %v718 = vunpack.c.l.s4 1966171168
    %v719 = vunpack.c.0.s8 %v718
    %v720 = vlaneseq
    %v721 = vshrl.u32 %v720, 7
    %v722 = vsub.s32 %v719, %v721
    %v723 = vrot.slane %v715, %v722
    %v725 = vunpack.c.l.s4 1966171168
    %v726 = vunpack.c.0.s8 %v725
    %v727 = vlaneseq
    %v728 = vshrl.u32 %v727, 7
    %v729 = vsub.s32 %v726, %v728
    %v730 = vrot.slane %v716, %v729
    %v731 = vlaneseq
    %v732 = vshrl.u32 %v731, 7
    %v733 = vsub.s32 0, %v732
    %v734 = vrot.slane %v723, %v733
    %v735 = vlaneseq
    %v736 = vshrl.u32 %v735, 7
    %v737 = vsub.s32 0, %v736
    %v738 = vrot.slane %v730, %v737
    %v741 = vmul.f32 %v520, %v734
    %v742 = vmul.f32 %v521, %v738
    %v743 = vld [vmem:[%s9] sm:$0xf]
    %v744 = vld [vmem:[%s9 + $0x4] sm:$0xf]
    %v745 = vunpack.c.l.bf16 %v743
    %v746 = vunpack.c.l.bf16 %v744
    %v747 = vpack.c.bf16 %v746, %v745
    %v748 = vld [vmem:[%s10] sm:$0xf]
    %vm749 = vcmask 64512
    %v751 = vsel %vm749, %v747, 0
    %vm753 = vcmask 1043456
    %v755 = vsel %vm753, %v748, 0
    %757 = vmatprep.subr.bf16.mxu0 0
    %758 = vmatpush1.bf16.msra.mxu0 %v755
    %759 = vmatprep.subr.bf16.mxu0 0
    %760 = vmatpush1.bf16.msra.mxu0 0
    %761 = vmatprep.subr.bf16.mxu0 0
    %762 = vmatpush1.bf16.msra.mxu0 0
    %763 = vmatprep.subr.bf16.mxu0 0
    %764 = vmatpush1.bf16.msra.mxu0 0
    %765 = vmatprep.subr.bf16.mxu0 0
    %766 = vmatpush1.bf16.msra.mxu0 0
    %767 = vmatprep.subr.bf16.mxu0 0
    %768 = vmatpush1.bf16.msra.mxu0 0
    %769 = vmatprep.subr.bf16.mxu0 0
    %770 = vmatpush1.bf16.msra.mxu0 0
    %771 = vmatprep.subr.bf16.mxu0 0
    %772 = vmatpush1.bf16.msra.mxu0 0
    %773 = vmatprep.subr.bf16.mxu0 0
    %774 = vmatpush1.bf16.msra.mxu0 0
    %775 = vmatprep.subr.bf16.mxu0 0
    %776 = vmatpush1.bf16.msra.mxu0 0
    %777 = vmatprep.subr.bf16.mxu0 0
    %778 = vmatpush1.bf16.msra.mxu0 0
    %779 = vmatprep.subr.bf16.mxu0 0
    %780 = vmatpush1.bf16.msra.mxu0 0
    %781 = vmatprep.subr.bf16.mxu0 0
    %782 = vmatpush1.bf16.msra.mxu0 0
    %783 = vmatprep.subr.bf16.mxu0 0
    %784 = vmatpush1.bf16.msra.mxu0 0
    %785 = vmatprep.subr.bf16.mxu0 0
    %786 = vmatpush1.bf16.msra.mxu0 0
    %787 = vmatprep.subr.bf16.mxu0 0
    %788 = vmatpush1.bf16.msra.mxu0 0
    %789 = vmatprep.mubr.bf16.mxu0 0
    %790 = vmatmul.mubr.bf16.gmra.mrb[0].mxu0 %v751
    %v791 = vpop.f32.mrb[0].mxu0
    %v792 = vadd.f32 0.0, %v791
    %v793 = vpop.f32.mrb[0].mxu0
    %v794 = vpop.f32.mrb[0].mxu0
    %v795 = vadd.f32 0.0, %v794
    %v796 = vpop.f32.mrb[0].mxu0
    %797 = vdwg.mxu0
    %v798 = vld [vmem:[%s11] sm:$0x1]
    %v800 = vlaneseq
    %v801 = vshrl.u32 %v800, 7
    %v802 = vsub.s32 0, %v801
    %v803 = vrot.slane %v798, %v802
    %v805 = vmul.f32 %v792, %v803
    %v806 = vmul.f32 %v795, %v803
    %v807 = vld [vmem:[%s12] sm:$0x1]
    %v809 = vlaneseq
    %v810 = vshrl.u32 %v809, 7
    %v811 = vsub.s32 0, %v810
    %v812 = vrot.slane %v807, %v811
    %v814 = vadd.f32 %v805, %v812
    %v815 = vadd.f32 %v806, %v812
    %v816 = vadd.f32 %v741, %v814
    %v817 = vadd.f32 %v742, %v815
    %v818 = vmax.f32 %v816, 0.0
    %v819 = vmax.f32 %v817, 0.0
    %820 = vst [vmem:[#allocation5] sm:$0xff] %v818
    %821 = vst [vmem:[#allocation5 + $0x8] sm:$0xff] %v819
    // Predicated region
    $region58: #{tpu_custom_call.1} parent=1 // pred_check
      _
    $region59: #{tpu_custom_call.1} parent=1 // pred_check_branch
      %823 = sbr.rel (0) target = $region61
    $region60: #{tpu_custom_call.1} parent=1 // pred_region
      %s825 = ssub.s32 256, 256
      %826 = vsyncadd [#allocation4], %s825
      %s827 = sshll.u32 [#allocation5], 4
      %s828 = int_to_ptr.vmem [resolvable:$true] %s827
      %833 = dma.vmem_to_hbm [thread:$0]  %s828, 256, %s13, [#allocation4], 128, 128, 8
    $region61: #{tpu_custom_call.1} parent=1 // pred_fallthru
      _
    // Predicated region
    $region62: #{tpu_custom_call.1} parent=1 // pred_check
      _
    $region63: #{tpu_custom_call.1} parent=1 // pred_check_branch
      %835 = sbr.rel (0) target = $region65
    $region64: #{tpu_custom_call.1} parent=1 // pred_region
      %836 = dma.done [#allocation4], 256
    $region65: #{tpu_custom_call.1} parent=1 // pred_fallthru
      _
    %837 = vsyncpa [#allocation3], 1
    %838 = vsyncpa [#allocation4], 1

</llo_original>
